<compile_context>
chip_gen: v6e
topology: v6e:2x2x1
jax: 0.10.0
libtpu: 0.0.40
codegen_flags: <defaults>
</compile_context>

<pallas_src>
import jax
import jax.numpy as jnp
from jax.experimental import pallas as pl
from jax.experimental.pallas import tpu as pltpu


# ----------------------------- kernel ---------------------------------------

def _dot(a, w_ref):
    w = w_ref[...]
    # cast activations to the weight dtype (no-op for f32 weights); accumulate f32
    return jnp.dot(a.astype(w.dtype), w, preferred_element_type=jnp.float32)


def _layer_norm(h, gamma, beta, eps=1e-5):
    # PyTorch nn.LayerNorm: biased variance over last dim, eps inside sqrt.
    mu = jnp.mean(h, axis=-1, keepdims=True)
    var = jnp.mean((h - mu) ** 2, axis=-1, keepdims=True)
    return (h - mu) * jax.lax.rsqrt(var + eps) * gamma + beta


def strategic_kernel(x_ref, w_fe0_ref, w_fe1_ref, w_heads_ref, w_mid_ref,
                     w_a2_ref, bias_ref, o_ref):
    H = w_fe0_ref.shape[1]                 # hidden_size
    heads_w = w_heads_ref.shape[1]         # 4 * (hidden_size // 2)
    hh = heads_w // 4
    A = o_ref.shape[1]                     # action_size

    bias = bias_ref[...]                   # (16, >=128) packed bias/LN slab

    def brow(i, n):
        return bias[i:i + 1, 0:n]

    x = x_ref[...]

    # ---- feature extraction: (Linear -> LayerNorm -> ReLU) x 2 ----
    h = _dot(x, w_fe0_ref) + brow(0, H)
    h = jnp.maximum(_layer_norm(h, brow(1, H), brow(2, H)), 0.0)
    h = _dot(h, w_fe1_ref) + brow(3, H)
    h = jnp.maximum(_layer_norm(h, brow(4, H), brow(5, H)), 0.0)

    # ---- attention (seq_len == 1) + four strategic/value heads ----
    # softmax over a single key position is exactly 1, so attention reduces to
    # fc_out(value(h)); that linear map is folded host-side into w_heads, so a
    # single H -> 4*hh matmul produces [infection | cure | cooperation | value_h].
    heads = jnp.maximum(_dot(h, w_heads_ref) + brow(6, heads_w), 0.0)

    # ---- merged advantage-hidden + value matmul: (4*hh) -> (hh + 1) ----
    # w_mid is block structured: rows 0:3hh / cols 0:hh hold w_a1 (advantage
    # stream takes the concat of the three strategic heads = heads[:, :3hh]),
    # rows 3hh:4hh / col hh hold w_v2 (value stream), zeros elsewhere.
    mid = _dot(heads, w_mid_ref) + brow(7, hh + 1)
    adv_h = jnp.maximum(mid[:, 0:hh], 0.0)          # ReLU only on advantage part
    value = mid[:, hh:hh + 1]                       # (B, 1)

    # ---- advantage output + dueling combination ----
    advantages = _dot(adv_h, w_a2_ref) + brow(8, A)  # (B, A)
    o_ref[...] = value + (advantages
                          - jnp.mean(advantages, axis=1, keepdims=True))


# ----------------------------- host-side packing -----------------------------

def pack_params(p, weight_dtype=jnp.float32):
    """One-time fold/pack of raw module params into the kernel's 6 input slabs.

    weight_dtype=jnp.bfloat16 halves weight traffic / MXU passes on v6e/v7x;
    keep f32 (default) on v5e or when bit-tight numerics matter.
    """
    H = p["w_fe0"].shape[1]
    hh = p["w_inf"].shape[1]
    A = p["w_a2"].shape[1]

    # seq_len == 1 attention collapse: out = fc_out(value(h))  (q/k are dead)
    w_attn = p["wv"] @ p["wo"]
    b_attn = p["bv"] @ p["wo"] + p["bo"]                                # (1, H)

    # fuse the four H -> hh heads, then fold the attention linear through them
    # (exact: no nonlinearity between the attention output and the head Linears)
    w_heads_raw = jnp.concatenate([p["w_inf"], p["w_cure"], p["w_coop"],
                                   p["w_v1"]], axis=1)                  # (H, 4hh)
    b_heads_raw = jnp.concatenate([p["b_inf"], p["b_cure"], p["b_coop"],
                                   p["b_v1"]], axis=1)                  # (1, 4hh)
    w_heads = w_attn @ w_heads_raw                                      # (H, 4hh)
    b_heads = b_attn @ w_heads_raw + b_heads_raw                        # (1, 4hh)

    # block-structured merge of advantage-hidden (w_a1) and value (w_v2)
    w_mid = jnp.zeros((4 * hh, hh + 1), jnp.float32)
    w_mid = w_mid.at[0:3 * hh, 0:hh].set(p["w_a1"])
    w_mid = w_mid.at[3 * hh:4 * hh, hh:hh + 1].set(p["w_v2"])

    # single lane-padded bias / LayerNorm slab (rows 0..8 used, padded to 16)
    width = max(H, 4 * hh, hh + 1, A)
    width = ((width + 127) // 128) * 128
    bias = jnp.zeros((16, width), jnp.float32)
    for i, r in enumerate([p["b_fe0"][0], p["g_ln0"][0], p["be_ln0"][0],
                           p["b_fe1"][0], p["g_ln1"][0], p["be_ln1"][0],
                           b_heads[0]]):
        bias = bias.at[i, :r.shape[0]].set(r)
    bias = bias.at[7, :hh].set(p["b_a1"][0])
    bias = bias.at[7, hh].set(p["b_v2"][0, 0])
    bias = bias.at[8, :A].set(p["b_a2"][0])

    return {
        "w_fe0": p["w_fe0"].astype(weight_dtype),
        "w_fe1": p["w_fe1"].astype(weight_dtype),
        "w_heads": w_heads.astype(weight_dtype),
        "w_mid": w_mid.astype(weight_dtype),
        "w_a2": p["w_a2"].astype(weight_dtype),
        "bias": bias,
    }


_PACKED_ORDER = ["w_fe0", "w_fe1", "w_heads", "w_mid", "w_a2", "bias"]


# ----------------------------- wrapper ---------------------------------------

def _num_tensorcores():
    """Best-effort TensorCore-per-chip count (1 on v5e/v6e, 2 on v7x)."""
    try:
        info = pltpu.get_tpu_info()
        for attr in ("num_cores", "num_tensorcores", "tensorcores_per_chip",
                     "cores_per_chip"):
            n = getattr(info, attr, None)
            if isinstance(n, int) and n > 0:
                return n
    except Exception:
        pass
    try:
        n = getattr(jax.devices()[0], "num_cores", None)
        if isinstance(n, int) and n > 0:
            return n
    except Exception:
        pass
    return 1


def _auto_block_b(batch, cap=4096):
    """Largest batch tile that (a) respects the (8,128) sublane rule, (b) stays
    under `cap`, and (c) yields at least one grid block per TensorCore."""
    if batch <= 8 or batch % 8 != 0:
        return batch                      # single full-batch block (always legal)
    target_blocks = max(_num_tensorcores(), -(-batch // cap))
    best = None
    b = 8
    while b <= min(batch, cap):
        if batch % b == 0 and batch // b >= target_blocks:
            best = b
        b += 8
    return best if best is not None else batch


def _sanitize_block_b(batch, block_b):
    if block_b is None:
        return _auto_block_b(batch)
    if block_b == batch:
        return block_b
    if batch % block_b == 0 and block_b % 8 == 0:
        return block_b
    # illegal tile (would violate the (8,128) rule or not divide the batch)
    return _auto_block_b(batch)


def strategic_forward(x, packed, block_b=None):
    """Full StrategicNetworkArchitecture forward pass in one pallas_call.

    The batch axis is tiled (marked "parallel" so multi-TC chips shard it);
    weights use constant index_maps so they stay VMEM-resident across steps.
    """
    batch = x.shape[0]
    action_size = packed["w_a2"].shape[1]

    block_b = _sanitize_block_b(batch, block_b)
    num_blocks = batch // block_b

    def whole_spec(arr):
        nd = arr.ndim
        return pl.BlockSpec(arr.shape, lambda i, _n=nd: (0,) * _n)

    ordered = [packed[k] for k in _PACKED_ORDER]

    fn = pl.pallas_call(
        strategic_kernel,
        out_shape=jax.ShapeDtypeStruct((batch, action_size), jnp.float32),
        grid=(num_blocks,),
        in_specs=[pl.BlockSpec((block_b, x.shape[1]), lambda i: (i, 0))]
                 + [whole_spec(a) for a in ordered],
        out_specs=pl.BlockSpec((block_b, action_size), lambda i: (i, 0)),
        compiler_params=pltpu.CompilerParams(
            dimension_semantics=("parallel",)),
    )
    return fn(x, *ordered)


# ----------------------------- init + reference ------------------------------

def init_params(key, state_size, action_size, hidden_size):
    """Deterministic synthetic init (PyTorch-style uniform(-1/sqrt(fan_in)))."""
    hh = hidden_size // 2

    def lin(k, fan_in, fan_out):
        k1, k2 = jax.random.split(k)
        bound = 1.0 / (fan_in ** 0.5)
        w = jax.random.uniform(k1, (fan_in, fan_out), jnp.float32, -bound, bound)
        b = jax.random.uniform(k2, (1, fan_out), jnp.float32, -bound, bound)
        return w, b

    keys = jax.random.split(key, 13)
    p = {}
    p["w_fe0"], p["b_fe0"] = lin(keys[0], state_size, hidden_size)
    p["g_ln0"] = jnp.ones((1, hidden_size), jnp.float32)
    p["be_ln0"] = jnp.zeros((1, hidden_size), jnp.float32)
    p["w_fe1"], p["b_fe1"] = lin(keys[1], hidden_size, hidden_size)
    p["g_ln1"] = jnp.ones((1, hidden_size), jnp.float32)
    p["be_ln1"] = jnp.zeros((1, hidden_size), jnp.float32)
    # q/k kept for structural parity with the PyTorch module, but they are
    # mathematically dead under seq_len == 1 and are NOT passed to the kernel.
    p["wq"], p["bq"] = lin(keys[2], hidden_size, hidden_size)
    p["wk"], p["bk"] = lin(keys[3], hidden_size, hidden_size)
    p["wv"], p["bv"] = lin(keys[4], hidden_size, hidden_size)
    p["wo"], p["bo"] = lin(keys[5], hidden_size, hidden_size)
    p["w_inf"], p["b_inf"] = lin(keys[6], hidden_size, hh)
    p["w_cure"], p["b_cure"] = lin(keys[7], hidden_size, hh)
    p["w_coop"], p["b_coop"] = lin(keys[8], hidden_size, hh)
    p["w_v1"], p["b_v1"] = lin(keys[9], hidden_size, hh)
    p["w_v2"], p["b_v2"] = lin(keys[10], hh, 1)
    p["w_a1"], p["b_a1"] = lin(keys[11], 3 * hh, hh)
    p["w_a2"], p["b_a2"] = lin(keys[12], hh, action_size)
    return p


def reference_forward(x, p):
    """Pure-JAX reference matching the PyTorch module semantics."""
    def ln(h, g, b, eps=1e-5):
        mu = jnp.mean(h, -1, keepdims=True)
        var = jnp.mean((h - mu) ** 2, -1, keepdims=True)
        return (h - mu) / jnp.sqrt(var + eps) * g + b

    h = jnp.maximum(ln(x @ p["w_fe0"] + p["b_fe0"], p["g_ln0"], p["be_ln0"]), 0.0)
    h = jnp.maximum(ln(h @ p["w_fe1"] + p["b_fe1"], p["g_ln1"], p["be_ln1"]), 0.0)
    # seq_len == 1 attention: softmax over one key == 1 -> fc_out(value(h))
    att = (h @ p["wv"] + p["bv"]) @ p["wo"] + p["bo"]
    inf = jnp.maximum(att @ p["w_inf"] + p["b_inf"], 0.0)
    cure = jnp.maximum(att @ p["w_cure"] + p["b_cure"], 0.0)
    coop = jnp.maximum(att @ p["w_coop"] + p["b_coop"], 0.0)
    comb = jnp.concatenate([inf, cure, coop], axis=1)
    adv_h = jnp.maximum(comb @ p["w_a1"] + p["b_a1"], 0.0)
    adv = adv_h @ p["w_a2"] + p["b_a2"]
    val = jnp.maximum(att @ p["w_v1"] + p["b_v1"], 0.0) @ p["w_v2"] + p["b_v2"]
    return val + (adv - jnp.mean(adv, axis=1, keepdims=True))


# ----------------------------- demo / check ----------------------------------

if __name__ == "__main__":
    STATE_SIZE, ACTION_SIZE, HIDDEN = 32, 8, 32

    key = jax.random.PRNGKey(0)
    kx, kp, kx2, kx3 = jax.random.split(key, 4)
    params = init_params(kp, STATE_SIZE, ACTION_SIZE, HIDDEN)
    packed = pack_params(params)   # one-time fold/pack (f32 weights)

    # small, spec-consistent run (batch=2): single full-batch block
    x = jax.random.normal(kx, (2, STATE_SIZE), dtype=jnp.float32)
    q_values = strategic_forward(x, packed)
    jax.block_until_ready(q_values)
    assert q_values.shape == (2, ACTION_SIZE)
    assert q_values.dtype == jnp.float32
    ref = reference_forward(x, params)
    assert jnp.allclose(q_values, ref, rtol=1e-3, atol=1e-3), \
        float(jnp.max(jnp.abs(q_values - ref)))

    # larger batched run exercising the explicit batch grid
    xb = jax.random.normal(kx2, (256, STATE_SIZE), dtype=jnp.float32)
    qb = strategic_forward(xb, packed, block_b=64)     # grid=(4,), "parallel"
    jax.block_until_ready(qb)
    refb = reference_forward(xb, params)
    assert jnp.allclose(qb, refb, rtol=1e-3, atol=1e-3), \
        float(jnp.max(jnp.abs(qb - refb)))

    # auto block selection path (single large block on 1-TC chips, >=2 on v7x)
    # plus the invalid-block_b guard (falls back instead of failing to lower)
    xc = jax.random.normal(kx3, (128, STATE_SIZE), dtype=jnp.float32)
    qc = strategic_forward(xc, packed)                  # auto block_b
    qd = strategic_forward(xc, packed, block_b=12)      # invalid -> sanitized
    jax.block_until_ready(qc)
    jax.block_until_ready(qd)
    refc = reference_forward(xc, params)
    assert jnp.allclose(qc, refc, rtol=1e-3, atol=1e-3)
    assert jnp.allclose(qd, refc, rtol=1e-3, atol=1e-3)

    print("KERNEL_OK")
</pallas_src>

<mosaic_0001>
module attributes {stable_mosaic.version = 11 : i64} {
  func.func @strategic_kernel(%arg0: i32, %arg1: memref<2x32xf32, #tpu.memory_space<vmem>>, %arg2: memref<32x32xf32, #tpu.memory_space<vmem>>, %arg3: memref<32x32xf32, #tpu.memory_space<vmem>>, %arg4: memref<32x64xf32, #tpu.memory_space<vmem>>, %arg5: memref<64x17xf32, #tpu.memory_space<vmem>>, %arg6: memref<16x8xf32, #tpu.memory_space<vmem>>, %arg7: memref<16x128xf32, #tpu.memory_space<vmem>>, %arg8: memref<2x8xf32, #tpu.memory_space<vmem>>) attributes {dimension_semantics = [#tpu.dimension_semantics<parallel>], iteration_bounds = array<i64: 1>, scalar_prefetch = 0 : i64, scratch_operands = 0 : i64, tpu.core_type = #tpu.core_type<tc>, window_params = [{transform_indices = @transform_0, window_bounds = array<i64: 2, 32>}, {pipeline_mode = #tpu.pipeline_mode<synchronous>, transform_indices = @transform_1, window_bounds = array<i64: 32, 32>}, {pipeline_mode = #tpu.pipeline_mode<synchronous>, transform_indices = @transform_2, window_bounds = array<i64: 32, 32>}, {pipeline_mode = #tpu.pipeline_mode<synchronous>, transform_indices = @transform_3, window_bounds = array<i64: 32, 64>}, {pipeline_mode = #tpu.pipeline_mode<synchronous>, transform_indices = @transform_4, window_bounds = array<i64: 64, 17>}, {pipeline_mode = #tpu.pipeline_mode<synchronous>, transform_indices = @transform_5, window_bounds = array<i64: 16, 8>}, {pipeline_mode = #tpu.pipeline_mode<synchronous>, transform_indices = @transform_6, window_bounds = array<i64: 16, 128>}, {transform_indices = @transform_7, window_bounds = array<i64: 2, 8>}]} {
    %c0 = arith.constant 0 : index
    %c0_0 = arith.constant 0 : index
    %0 = vector.load %arg7[%c0, %c0_0] : memref<16x128xf32, #tpu.memory_space<vmem>>, vector<16x128xf32>
    %c0_1 = arith.constant 0 : index
    %c0_2 = arith.constant 0 : index
    %1 = vector.load %arg1[%c0_1, %c0_2] : memref<2x32xf32, #tpu.memory_space<vmem>>, vector<2x32xf32>
    %c0_3 = arith.constant 0 : index
    %c0_4 = arith.constant 0 : index
    %2 = vector.load %arg2[%c0_3, %c0_4] : memref<32x32xf32, #tpu.memory_space<vmem>>, vector<32x32xf32>
    %cst = arith.constant dense<0.000000e+00> : vector<2x32xf32>
    %3 = tpu.matmul %1, %2, %cst {dimension_numbers = #tpu.dot_dimension_numbers<[1], [0], [0], [1], [0, 0, 1, 1], [], []>} : vector<2x32xf32>, vector<32x32xf32>, vector<2x32xf32> -> vector<2x32xf32>
    %4 = vector.extract_strided_slice %0 {offsets = [0, 0], sizes = [1, 32], strides = [1, 1]} : vector<16x128xf32> to vector<1x32xf32>
    %5 = vector.broadcast %4 : vector<1x32xf32> to vector<2x32xf32>
    %6 = arith.addf %3, %5 : vector<2x32xf32>
    %7 = vector.extract_strided_slice %0 {offsets = [1, 0], sizes = [1, 32], strides = [1, 1]} : vector<16x128xf32> to vector<1x32xf32>
    %8 = vector.extract_strided_slice %0 {offsets = [2, 0], sizes = [1, 32], strides = [1, 1]} : vector<16x128xf32> to vector<1x32xf32>
    %cst_5 = arith.constant dense<0.000000e+00> : vector<2xf32>
    %9 = vector.multi_reduction <add>, %6, %cst_5 [1] : vector<2x32xf32> to vector<2xf32>
    %10 = vector.shape_cast %9 : vector<2xf32> to vector<2x1xf32>
    %cst_6 = arith.constant 3.200000e+01 : f32
    %11 = vector.broadcast %cst_6 : f32 to vector<2x1xf32>
    %12 = arith.divf %10, %11 : vector<2x1xf32>
    %13 = vector.broadcast %12 : vector<2x1xf32> to vector<2x32xf32>
    %14 = arith.subf %6, %13 : vector<2x32xf32>
    %15 = arith.mulf %14, %14 : vector<2x32xf32>
    %cst_7 = arith.constant dense<0.000000e+00> : vector<2xf32>
    %16 = vector.multi_reduction <add>, %15, %cst_7 [1] : vector<2x32xf32> to vector<2xf32>
    %17 = vector.shape_cast %16 : vector<2xf32> to vector<2x1xf32>
    %cst_8 = arith.constant 3.200000e+01 : f32
    %18 = vector.broadcast %cst_8 : f32 to vector<2x1xf32>
    %19 = arith.divf %17, %18 : vector<2x1xf32>
    %20 = vector.broadcast %12 : vector<2x1xf32> to vector<2x32xf32>
    %21 = arith.subf %6, %20 : vector<2x32xf32>
    %cst_9 = arith.constant 9.99999974E-6 : f32
    %22 = vector.broadcast %cst_9 : f32 to vector<2x1xf32>
    %23 = arith.addf %19, %22 : vector<2x1xf32>
    %24 = math.rsqrt %23 : vector<2x1xf32>
    %25 = vector.broadcast %24 : vector<2x1xf32> to vector<2x32xf32>
    %26 = arith.mulf %21, %25 : vector<2x32xf32>
    %27 = vector.broadcast %7 : vector<1x32xf32> to vector<2x32xf32>
    %28 = arith.mulf %26, %27 : vector<2x32xf32>
    %29 = vector.broadcast %8 : vector<1x32xf32> to vector<2x32xf32>
    %30 = arith.addf %28, %29 : vector<2x32xf32>
    %cst_10 = arith.constant 0.000000e+00 : f32
    %31 = vector.broadcast %cst_10 : f32 to vector<2x32xf32>
    %32 = arith.maximumf %30, %31 : vector<2x32xf32>
    %c0_11 = arith.constant 0 : index
    %c0_12 = arith.constant 0 : index
    %33 = vector.load %arg3[%c0_11, %c0_12] : memref<32x32xf32, #tpu.memory_space<vmem>>, vector<32x32xf32>
    %cst_13 = arith.constant dense<0.000000e+00> : vector<2x32xf32>
    %34 = tpu.matmul %32, %33, %cst_13 {dimension_numbers = #tpu.dot_dimension_numbers<[1], [0], [0], [1], [0, 0, 1, 1], [], []>} : vector<2x32xf32>, vector<32x32xf32>, vector<2x32xf32> -> vector<2x32xf32>
    %35 = vector.extract_strided_slice %0 {offsets = [3, 0], sizes = [1, 32], strides = [1, 1]} : vector<16x128xf32> to vector<1x32xf32>
    %36 = vector.broadcast %35 : vector<1x32xf32> to vector<2x32xf32>
    %37 = arith.addf %34, %36 : vector<2x32xf32>
    %38 = vector.extract_strided_slice %0 {offsets = [4, 0], sizes = [1, 32], strides = [1, 1]} : vector<16x128xf32> to vector<1x32xf32>
    %39 = vector.extract_strided_slice %0 {offsets = [5, 0], sizes = [1, 32], strides = [1, 1]} : vector<16x128xf32> to vector<1x32xf32>
    %cst_14 = arith.constant dense<0.000000e+00> : vector<2xf32>
    %40 = vector.multi_reduction <add>, %37, %cst_14 [1] : vector<2x32xf32> to vector<2xf32>
    %41 = vector.shape_cast %40 : vector<2xf32> to vector<2x1xf32>
    %cst_15 = arith.constant 3.200000e+01 : f32
    %42 = vector.broadcast %cst_15 : f32 to vector<2x1xf32>
    %43 = arith.divf %41, %42 : vector<2x1xf32>
    %44 = vector.broadcast %43 : vector<2x1xf32> to vector<2x32xf32>
    %45 = arith.subf %37, %44 : vector<2x32xf32>
    %46 = arith.mulf %45, %45 : vector<2x32xf32>
    %cst_16 = arith.constant dense<0.000000e+00> : vector<2xf32>
    %47 = vector.multi_reduction <add>, %46, %cst_16 [1] : vector<2x32xf32> to vector<2xf32>
    %48 = vector.shape_cast %47 : vector<2xf32> to vector<2x1xf32>
    %cst_17 = arith.constant 3.200000e+01 : f32
    %49 = vector.broadcast %cst_17 : f32 to vector<2x1xf32>
    %50 = arith.divf %48, %49 : vector<2x1xf32>
    %51 = vector.broadcast %43 : vector<2x1xf32> to vector<2x32xf32>
    %52 = arith.subf %37, %51 : vector<2x32xf32>
    %cst_18 = arith.constant 9.99999974E-6 : f32
    %53 = vector.broadcast %cst_18 : f32 to vector<2x1xf32>
    %54 = arith.addf %50, %53 : vector<2x1xf32>
    %55 = math.rsqrt %54 : vector<2x1xf32>
    %56 = vector.broadcast %55 : vector<2x1xf32> to vector<2x32xf32>
    %57 = arith.mulf %52, %56 : vector<2x32xf32>
    %58 = vector.broadcast %38 : vector<1x32xf32> to vector<2x32xf32>
    %59 = arith.mulf %57, %58 : vector<2x32xf32>
    %60 = vector.broadcast %39 : vector<1x32xf32> to vector<2x32xf32>
    %61 = arith.addf %59, %60 : vector<2x32xf32>
    %cst_19 = arith.constant 0.000000e+00 : f32
    %62 = vector.broadcast %cst_19 : f32 to vector<2x32xf32>
    %63 = arith.maximumf %61, %62 : vector<2x32xf32>
    %c0_20 = arith.constant 0 : index
    %c0_21 = arith.constant 0 : index
    %64 = vector.load %arg4[%c0_20, %c0_21] : memref<32x64xf32, #tpu.memory_space<vmem>>, vector<32x64xf32>
    %cst_22 = arith.constant dense<0.000000e+00> : vector<2x64xf32>
    %65 = tpu.matmul %63, %64, %cst_22 {dimension_numbers = #tpu.dot_dimension_numbers<[1], [0], [0], [1], [0, 0, 1, 1], [], []>} : vector<2x32xf32>, vector<32x64xf32>, vector<2x64xf32> -> vector<2x64xf32>
    %66 = vector.extract_strided_slice %0 {offsets = [6, 0], sizes = [1, 64], strides = [1, 1]} : vector<16x128xf32> to vector<1x64xf32>
    %67 = vector.broadcast %66 : vector<1x64xf32> to vector<2x64xf32>
    %68 = arith.addf %65, %67 : vector<2x64xf32>
    %cst_23 = arith.constant 0.000000e+00 : f32
    %69 = vector.broadcast %cst_23 : f32 to vector<2x64xf32>
    %70 = arith.maximumf %68, %69 : vector<2x64xf32>
    %c0_24 = arith.constant 0 : index
    %c0_25 = arith.constant 0 : index
    %71 = vector.load %arg5[%c0_24, %c0_25] : memref<64x17xf32, #tpu.memory_space<vmem>>, vector<64x17xf32>
    %cst_26 = arith.constant dense<0.000000e+00> : vector<2x17xf32>
    %72 = tpu.matmul %70, %71, %cst_26 {dimension_numbers = #tpu.dot_dimension_numbers<[1], [0], [0], [1], [0, 0, 1, 1], [], []>} : vector<2x64xf32>, vector<64x17xf32>, vector<2x17xf32> -> vector<2x17xf32>
    %73 = vector.extract_strided_slice %0 {offsets = [7, 0], sizes = [1, 17], strides = [1, 1]} : vector<16x128xf32> to vector<1x17xf32>
    %74 = vector.broadcast %73 : vector<1x17xf32> to vector<2x17xf32>
    %75 = arith.addf %72, %74 : vector<2x17xf32>
    %76 = vector.extract_strided_slice %75 {offsets = [0, 0], sizes = [2, 16], strides = [1, 1]} : vector<2x17xf32> to vector<2x16xf32>
    %cst_27 = arith.constant 0.000000e+00 : f32
    %77 = vector.broadcast %cst_27 : f32 to vector<2x16xf32>
    %78 = arith.maximumf %76, %77 : vector<2x16xf32>
    %79 = vector.extract_strided_slice %75 {offsets = [0, 16], sizes = [2, 1], strides = [1, 1]} : vector<2x17xf32> to vector<2x1xf32>
    %c0_28 = arith.constant 0 : index
    %c0_29 = arith.constant 0 : index
    %80 = vector.load %arg6[%c0_28, %c0_29] : memref<16x8xf32, #tpu.memory_space<vmem>>, vector<16x8xf32>
    %cst_30 = arith.constant dense<0.000000e+00> : vector<2x8xf32>
    %81 = tpu.matmul %78, %80, %cst_30 {dimension_numbers = #tpu.dot_dimension_numbers<[1], [0], [0], [1], [0, 0, 1, 1], [], []>} : vector<2x16xf32>, vector<16x8xf32>, vector<2x8xf32> -> vector<2x8xf32>
    %82 = vector.extract_strided_slice %0 {offsets = [8, 0], sizes = [1, 8], strides = [1, 1]} : vector<16x128xf32> to vector<1x8xf32>
    %83 = vector.broadcast %82 : vector<1x8xf32> to vector<2x8xf32>
    %84 = arith.addf %81, %83 : vector<2x8xf32>
    %cst_31 = arith.constant dense<0.000000e+00> : vector<2xf32>
    %85 = vector.multi_reduction <add>, %84, %cst_31 [1] : vector<2x8xf32> to vector<2xf32>
    %86 = vector.shape_cast %85 : vector<2xf32> to vector<2x1xf32>
    %cst_32 = arith.constant 8.000000e+00 : f32
    %87 = vector.broadcast %cst_32 : f32 to vector<2x1xf32>
    %88 = arith.divf %86, %87 : vector<2x1xf32>
    %89 = vector.broadcast %88 : vector<2x1xf32> to vector<2x8xf32>
    %90 = arith.subf %84, %89 : vector<2x8xf32>
    %91 = vector.broadcast %79 : vector<2x1xf32> to vector<2x8xf32>
    %92 = arith.addf %91, %90 : vector<2x8xf32>
    %c0_33 = arith.constant 0 : index
    %c0_34 = arith.constant 0 : index
    %93 = vector.load %arg8[%c0_33, %c0_34] : memref<2x8xf32, #tpu.memory_space<vmem>>, vector<2x8xf32>
    tpu.vector_store %arg8[%c0_33, %c0_34], %92 {strides = array<i32>} : memref<2x8xf32, #tpu.memory_space<vmem>>, vector<2x8xf32>,
    return
  }
  func.func @transform_0(%arg0: i32) -> (i32, i32) {
    %c0_i32 = arith.constant 0 : i32
    %c0_i32_0 = arith.constant 0 : i32
    return %arg0, %c0_i32 : i32, i32
  }
  func.func @transform_1(%arg0: i32) -> (i32, i32) {
    %c0_i32 = arith.constant 0 : i32
    %c0_i32_0 = arith.constant 0 : i32
    %c0_i32_1 = arith.constant 0 : i32
    return %c0_i32, %c0_i32_0 : i32, i32
  }
  func.func @transform_2(%arg0: i32) -> (i32, i32) {
    %c0_i32 = arith.constant 0 : i32
    %c0_i32_0 = arith.constant 0 : i32
    %c0_i32_1 = arith.constant 0 : i32
    return %c0_i32, %c0_i32_0 : i32, i32
  }
  func.func @transform_3(%arg0: i32) -> (i32, i32) {
    %c0_i32 = arith.constant 0 : i32
    %c0_i32_0 = arith.constant 0 : i32
    %c0_i32_1 = arith.constant 0 : i32
    return %c0_i32, %c0_i32_0 : i32, i32
  }
  func.func @transform_4(%arg0: i32) -> (i32, i32) {
    %c0_i32 = arith.constant 0 : i32
    %c0_i32_0 = arith.constant 0 : i32
    %c0_i32_1 = arith.constant 0 : i32
    return %c0_i32, %c0_i32_0 : i32, i32
  }
  func.func @transform_5(%arg0: i32) -> (i32, i32) {
    %c0_i32 = arith.constant 0 : i32
    %c0_i32_0 = arith.constant 0 : i32
    %c0_i32_1 = arith.constant 0 : i32
    return %c0_i32, %c0_i32_0 : i32, i32
  }
  func.func @transform_6(%arg0: i32) -> (i32, i32) {
    %c0_i32 = arith.constant 0 : i32
    %c0_i32_0 = arith.constant 0 : i32
    %c0_i32_1 = arith.constant 0 : i32
    return %c0_i32, %c0_i32_0 : i32, i32
  }
  func.func @transform_7(%arg0: i32) -> (i32, i32) {
    %c0_i32 = arith.constant 0 : i32
    %c0_i32_0 = arith.constant 0 : i32
    return %arg0, %c0_i32 : i32, i32
  }
}

</mosaic_0001>

<llo_original>
// kernel: tpu_custom_call.1
$region0: #{tpu_custom_call.1}
  #allocation0 [shape = 'u32[]', space=smem, size = 0x4, offset = 0x4, fixed_abs, tag = 'smem constant byte address 0x4 - core index']
  #allocation1 [shape = 'u32[144,128]{1,0:T(1,128)}', space=vmem, size = 0x12000, scoped, tag = 'internal scratch']
  %s0 = inlined_call_operand.hbm [shape: f32[2,32], index: 0, kind: input, shape index: {}]
  %s1 = inlined_call_operand.vmem [shape: f32[32,32], index: 1, kind: input, shape index: {}]
  %s2 = inlined_call_operand.vmem [shape: f32[32,32], index: 2, kind: input, shape index: {}]
  %s3 = inlined_call_operand.vmem [shape: f32[32,64], index: 3, kind: input, shape index: {}]
  %s4 = inlined_call_operand.vmem [shape: f32[64,17], index: 4, kind: input, shape index: {}]
  %s5 = inlined_call_operand.vmem [shape: f32[16,8], index: 5, kind: input, shape index: {}]
  %s6 = inlined_call_operand.vmem [shape: f32[16,128], index: 6, kind: input, shape index: {}]
  %s7 = inlined_call_operand.hbm [shape: f32[2,8], index: 7, kind: output, shape index: {}]
  %s8 = sld [smem:[#allocation0]]
  $region42: #{tpu_custom_call.1} parent=0
    _
  %s10 = ssub.s32 1, %s8
  %s11 = scalar_select 0, %s10, %s8
  $region1: #{tpu_custom_call.1} parent=0
    #allocation2 [shape = 'u8[1024]{0}', space=vmem, size = 0x400, scoped, tag = 'input window, operand 0, single buffered']
    #allocation3 [shape = 's32[1]{0}', space=sflag, size = 0x4, scoped, tag = 'scoped memory for tpu_custom_call.1']
    #allocation4 [shape = 's32[1]{0}', space=sflag, size = 0x4, scoped, tag = 'scoped memory for tpu_custom_call.1']
    #allocation5 [shape = 'u8[1024]{0}', space=vmem, size = 0x400, scoped, tag = 'output window, operand 0, single buffered']
    %12 = vsyncpa [#allocation3], 0
    %13 = vsyncpa [#allocation4], 0
    // Predicated region
    $region2: #{tpu_custom_call.1} parent=1 // pred_check
      _
    $region3: #{tpu_custom_call.1} parent=1 // pred_check_branch
      %15 = sbr.rel (0) target = $region5
    $region4: #{tpu_custom_call.1} parent=1 // pred_region
      %s17 = ssub.s32 32, 32
      %18 = vsyncadd [#allocation3], %s17
      %s20 = sshll.u32 [#allocation2], 4
      %s21 = int_to_ptr.vmem [resolvable:$true] %s20
      %23 = dma.hbm_to_vmem [thread:$0]  %s0, 32, %s21, [#allocation3]
    $region5: #{tpu_custom_call.1} parent=1 // pred_fallthru
      _
    // Predicated region
    $region6: #{tpu_custom_call.1} parent=1 // pred_check
      _
    $region7: #{tpu_custom_call.1} parent=1 // pred_check_branch
      %25 = sbr.rel (0) target = $region9
    $region8: #{tpu_custom_call.1} parent=1 // pred_region
      _
    $region9: #{tpu_custom_call.1} parent=1 // pred_fallthru
      _
    // Predicated region
    $region10: #{tpu_custom_call.1} parent=1 // pred_check
      _
    $region11: #{tpu_custom_call.1} parent=1 // pred_check_branch
      %27 = sbr.rel (0) target = $region13
    $region12: #{tpu_custom_call.1} parent=1 // pred_region
      _
    $region13: #{tpu_custom_call.1} parent=1 // pred_fallthru
      _
    // Predicated region
    $region14: #{tpu_custom_call.1} parent=1 // pred_check
      _
    $region15: #{tpu_custom_call.1} parent=1 // pred_check_branch
      %29 = sbr.rel (0) target = $region17
    $region16: #{tpu_custom_call.1} parent=1 // pred_region
      _
    $region17: #{tpu_custom_call.1} parent=1 // pred_fallthru
      _
    // Predicated region
    $region18: #{tpu_custom_call.1} parent=1 // pred_check
      _
    $region19: #{tpu_custom_call.1} parent=1 // pred_check_branch
      %31 = sbr.rel (0) target = $region21
    $region20: #{tpu_custom_call.1} parent=1 // pred_region
      _
    $region21: #{tpu_custom_call.1} parent=1 // pred_fallthru
      _
    // Predicated region
    $region22: #{tpu_custom_call.1} parent=1 // pred_check
      _
    $region23: #{tpu_custom_call.1} parent=1 // pred_check_branch
      %33 = sbr.rel (0) target = $region25
    $region24: #{tpu_custom_call.1} parent=1 // pred_region
      _
    $region25: #{tpu_custom_call.1} parent=1 // pred_fallthru
      _
    // Predicated region
    $region26: #{tpu_custom_call.1} parent=1 // pred_check
      _
    $region27: #{tpu_custom_call.1} parent=1 // pred_check_branch
      %35 = sbr.rel (0) target = $region29
    $region28: #{tpu_custom_call.1} parent=1 // pred_region
      _
    $region29: #{tpu_custom_call.1} parent=1 // pred_fallthru
      _
    // Predicated region
    $region30: #{tpu_custom_call.1} parent=1 // pred_check
      _
    $region31: #{tpu_custom_call.1} parent=1 // pred_check_branch
      %37 = sbr.rel (0) target = $region33
    $region32: #{tpu_custom_call.1} parent=1 // pred_region
      %38 = dma.done [#allocation3], 32
    $region33: #{tpu_custom_call.1} parent=1 // pred_fallthru
      _
    %v39 = vld [vmem:[%s6] sm:$0xff]
    %v40 = vld [vmem:[%s6 + $0x8] sm:$0xff]
    %v41 = vld [vmem:[#allocation2] sm:$0x3]
    %v42 = vld [vmem:[%s1] sm:$0xff]
    %v43 = vld [vmem:[%s1 + $0x8] sm:$0xff]
    %v44 = vld [vmem:[%s1 + $0x10] sm:$0xff]
    %v45 = vld [vmem:[%s1 + $0x18] sm:$0xff]
    %v46 = vlaneseq
    %v47 = vshrl.u32 %v46, 7
    %v48 = vsub.s32 0, %v47
    %v49 = vrot.slane %v39, %v48
    %vm50 = vcmask 261120
    %v52 = vsel %vm50, %v41, 0
    %54 = vmatprep.subr.mxu0 0.0
    %55 = vmatpush1.msra.mxu0 0.0
    %56 = vmatprep.subr.mxu0 0.0
    %57 = vmatpush1.msra.mxu0 0.0
    %58 = vmatprep.subr.mxu0 0.0
    %59 = vmatpush1.msra.mxu0 0.0
    %60 = vmatprep.subr.mxu0 0.0
    %61 = vmatpush1.msra.mxu0 0.0
    %62 = vmatprep.subr.mxu0 0.0
    %63 = vmatpush1.msra.mxu0 0.0
    %64 = vmatprep.subr.mxu0 0.0
    %65 = vmatpush1.msra.mxu0 0.0
    %66 = vmatprep.subr.mxu0 0.0
    %67 = vmatpush1.msra.mxu0 0.0
    %68 = vmatprep.subr.mxu0 0.0
    %69 = vmatpush1.msra.mxu0 0.0
    %70 = vmatprep.subr.mxu0 0.0
    %71 = vmatpush1.msra.mxu0 0.0
    %72 = vmatprep.subr.mxu0 0.0
    %73 = vmatpush1.msra.mxu0 0.0
    %74 = vmatprep.subr.mxu0 0.0
    %75 = vmatpush1.msra.mxu0 0.0
    %76 = vmatprep.subr.mxu0 0.0
    %77 = vmatpush1.msra.mxu0 0.0
    %78 = vmatprep.subr.mxu0 0.0
    %79 = vmatpush1.msra.mxu0 %v45
    %80 = vmatprep.subr.mxu0 0.0
    %81 = vmatpush1.msra.mxu0 %v44
    %82 = vmatprep.subr.mxu0 0.0
    %83 = vmatpush1.msra.mxu0 %v43
    %84 = vmatprep.subr.mxu0 0.0
    %85 = vmatpush1.msra.mxu0 %v42
    %86 = vmatprep.subr.mxu0 0.0
    %87 = vmatpush2.msra.mxu0 0.0
    %88 = vmatprep.subr.mxu0 0.0
    %89 = vmatpush2.msra.mxu0 0.0
    %90 = vmatprep.subr.mxu0 0.0
    %91 = vmatpush2.msra.mxu0 0.0
    %92 = vmatprep.subr.mxu0 0.0
    %93 = vmatpush2.msra.mxu0 0.0
    %94 = vmatprep.subr.mxu0 0.0
    %95 = vmatpush2.msra.mxu0 0.0
    %96 = vmatprep.subr.mxu0 0.0
    %97 = vmatpush2.msra.mxu0 0.0
    %98 = vmatprep.subr.mxu0 0.0
    %99 = vmatpush2.msra.mxu0 0.0
    %100 = vmatprep.subr.mxu0 0.0
    %101 = vmatpush2.msra.mxu0 0.0
    %102 = vmatprep.subr.mxu0 0.0
    %103 = vmatpush2.msra.mxu0 0.0
    %104 = vmatprep.subr.mxu0 0.0
    %105 = vmatpush2.msra.mxu0 0.0
    %106 = vmatprep.subr.mxu0 0.0
    %107 = vmatpush2.msra.mxu0 0.0
    %108 = vmatprep.subr.mxu0 0.0
    %109 = vmatpush2.msra.mxu0 0.0
    %110 = vmatprep.subr.mxu0 0.0
    %111 = vmatpush2.msra.mxu0 0.0
    %112 = vmatprep.subr.mxu0 0.0
    %113 = vmatpush2.msra.mxu0 0.0
    %114 = vmatprep.subr.mxu0 0.0
    %115 = vmatpush2.msra.mxu0 0.0
    %116 = vmatprep.subr.mxu0 0.0
    %117 = vmatpush2.msra.mxu0 0.0
    %118 = vmatprep.mubr.f32.mxu0 0.0
    %119 = vmatmul.mubr.f32.gmra.mxu0 %v52
    %v120 = vpop.f32.mrf.mxu0
    %v121 = vadd.f32 %v49, %v120
    %v122 = vpop.f32.mrf.mxu0
    %123 = vdwg.mxu0
    %vm124 = vcmask 254976
    %v125 = vsel %vm124, %v121, 0.0
    %126 = vadd.xlane.f32.xlu0 %v125
    %v127 = vpop.xlane.xlu0 %126
    %v128 = vrcp.pop 32.0
    %v129 = vmul.f32 %v127, %v128
    %v130 = vsub.f32 %v121, %v129
    %v131 = vmul.f32 %v130, %v130
    %v132 = vsel %vm124, %v131, 0.0
    %133 = vadd.xlane.f32.xlu0 %v132
    %v134 = vpop.xlane.xlu0 %133
    %v135 = vmul.f32 %v134, %v128
    %v136 = vadd.f32 %v135, 1e-05
    %v137 = vrsqrt.pop %v136
    %v138 = vmul.f32 %v130, %v137
    %v139 = vlaneseq
    %v140 = vshrl.u32 %v139, 7
    %v141 = vsub.s32 1, %v140
    %v142 = vrot.slane %v39, %v141
    %v143 = vmul.f32 %v138, %v142
    %v144 = vlaneseq
    %v145 = vshrl.u32 %v144, 7
    %v146 = vsub.s32 2, %v145
    %v147 = vrot.slane %v39, %v146
    %v148 = vadd.f32 %v143, %v147
    %v149 = vmax.f32 %v148, 0.0
    %v150 = vld [vmem:[%s2] sm:$0xff]
    %v151 = vld [vmem:[%s2 + $0x8] sm:$0xff]
    %v152 = vld [vmem:[%s2 + $0x10] sm:$0xff]
    %v153 = vld [vmem:[%s2 + $0x18] sm:$0xff]
    %v154 = vlaneseq
    %v155 = vshrl.u32 %v154, 7
    %v156 = vsub.s32 3, %v155
    %v157 = vrot.slane %v39, %v156
    %v159 = vsel %vm50, %v149, 0
    %161 = vmatprep.subr.mxu0 0.0
    %162 = vmatpush1.msra.mxu0 0.0
    %163 = vmatprep.subr.mxu0 0.0
    %164 = vmatpush1.msra.mxu0 0.0
    %165 = vmatprep.subr.mxu0 0.0
    %166 = vmatpush1.msra.mxu0 0.0
    %167 = vmatprep.subr.mxu0 0.0
    %168 = vmatpush1.msra.mxu0 0.0
    %169 = vmatprep.subr.mxu0 0.0
    %170 = vmatpush1.msra.mxu0 0.0
    %171 = vmatprep.subr.mxu0 0.0
    %172 = vmatpush1.msra.mxu0 0.0
    %173 = vmatprep.subr.mxu0 0.0
    %174 = vmatpush1.msra.mxu0 0.0
    %175 = vmatprep.subr.mxu0 0.0
    %176 = vmatpush1.msra.mxu0 0.0
    %177 = vmatprep.subr.mxu0 0.0
    %178 = vmatpush1.msra.mxu0 0.0
    %179 = vmatprep.subr.mxu0 0.0
    %180 = vmatpush1.msra.mxu0 0.0
    %181 = vmatprep.subr.mxu0 0.0
    %182 = vmatpush1.msra.mxu0 0.0
    %183 = vmatprep.subr.mxu0 0.0
    %184 = vmatpush1.msra.mxu0 0.0
    %185 = vmatprep.subr.mxu0 0.0
    %186 = vmatpush1.msra.mxu0 %v153
    %187 = vmatprep.subr.mxu0 0.0
    %188 = vmatpush1.msra.mxu0 %v152
    %189 = vmatprep.subr.mxu0 0.0
    %190 = vmatpush1.msra.mxu0 %v151
    %191 = vmatprep.subr.mxu0 0.0
    %192 = vmatpush1.msra.mxu0 %v150
    %193 = vmatprep.subr.mxu0 0.0
    %194 = vmatpush2.msra.mxu0 0.0
    %195 = vmatprep.subr.mxu0 0.0
    %196 = vmatpush2.msra.mxu0 0.0
    %197 = vmatprep.subr.mxu0 0.0
    %198 = vmatpush2.msra.mxu0 0.0
    %199 = vmatprep.subr.mxu0 0.0
    %200 = vmatpush2.msra.mxu0 0.0
    %201 = vmatprep.subr.mxu0 0.0
    %202 = vmatpush2.msra.mxu0 0.0
    %203 = vmatprep.subr.mxu0 0.0
    %204 = vmatpush2.msra.mxu0 0.0
    %205 = vmatprep.subr.mxu0 0.0
    %206 = vmatpush2.msra.mxu0 0.0
    %207 = vmatprep.subr.mxu0 0.0
    %208 = vmatpush2.msra.mxu0 0.0
    %209 = vmatprep.subr.mxu0 0.0
    %210 = vmatpush2.msra.mxu0 0.0
    %211 = vmatprep.subr.mxu0 0.0
    %212 = vmatpush2.msra.mxu0 0.0
    %213 = vmatprep.subr.mxu0 0.0
    %214 = vmatpush2.msra.mxu0 0.0
    %215 = vmatprep.subr.mxu0 0.0
    %216 = vmatpush2.msra.mxu0 0.0
    %217 = vmatprep.subr.mxu0 0.0
    %218 = vmatpush2.msra.mxu0 0.0
    %219 = vmatprep.subr.mxu0 0.0
    %220 = vmatpush2.msra.mxu0 0.0
    %221 = vmatprep.subr.mxu0 0.0
    %222 = vmatpush2.msra.mxu0 0.0
    %223 = vmatprep.subr.mxu0 0.0
    %224 = vmatpush2.msra.mxu0 0.0
    %225 = vmatprep.mubr.f32.mxu0 0.0
    %226 = vmatmul.mubr.f32.gmra.mxu0 %v159
    %v227 = vpop.f32.mrf.mxu0
    %v228 = vadd.f32 %v157, %v227
    %v229 = vpop.f32.mrf.mxu0
    %230 = vdwg.mxu0
    %v231 = vsel %vm124, %v228, 0.0
    %232 = vadd.xlane.f32.xlu0 %v231
    %v233 = vpop.xlane.xlu0 %232
    %v234 = vmul.f32 %v233, %v128
    %v235 = vsub.f32 %v228, %v234
    %v236 = vmul.f32 %v235, %v235
    %v237 = vsel %vm124, %v236, 0.0
    %238 = vadd.xlane.f32.xlu0 %v237
    %v239 = vpop.xlane.xlu0 %238
    %v240 = vmul.f32 %v239, %v128
    %v241 = vadd.f32 %v240, 1e-05
    %v242 = vrsqrt.pop %v241
    %v243 = vmul.f32 %v235, %v242
    %v244 = vlaneseq
    %v245 = vshrl.u32 %v244, 7
    %v246 = vsub.s32 4, %v245
    %v247 = vrot.slane %v39, %v246
    %v248 = vmul.f32 %v243, %v247
    %v249 = vlaneseq
    %v250 = vshrl.u32 %v249, 7
    %v251 = vsub.s32 5, %v250
    %v252 = vrot.slane %v39, %v251
    %v253 = vadd.f32 %v248, %v252
    %v254 = vmax.f32 %v253, 0.0
    %v255 = vld [vmem:[%s3] sm:$0xff]
    %v256 = vld [vmem:[%s3 + $0x8] sm:$0xff]
    %v257 = vld [vmem:[%s3 + $0x10] sm:$0xff]
    %v258 = vld [vmem:[%s3 + $0x18] sm:$0xff]
    %v259 = vlaneseq
    %v260 = vshrl.u32 %v259, 7
    %v261 = vsub.s32 6, %v260
    %v262 = vrot.slane %v39, %v261
    %v264 = vsel %vm50, %v254, 0
    %266 = vmatprep.subr.mxu0 0.0
    %267 = vmatpush1.msra.mxu0 0.0
    %268 = vmatprep.subr.mxu0 0.0
    %269 = vmatpush1.msra.mxu0 0.0
    %270 = vmatprep.subr.mxu0 0.0
    %271 = vmatpush1.msra.mxu0 0.0
    %272 = vmatprep.subr.mxu0 0.0
    %273 = vmatpush1.msra.mxu0 0.0
    %274 = vmatprep.subr.mxu0 0.0
    %275 = vmatpush1.msra.mxu0 0.0
    %276 = vmatprep.subr.mxu0 0.0
    %277 = vmatpush1.msra.mxu0 0.0
    %278 = vmatprep.subr.mxu0 0.0
    %279 = vmatpush1.msra.mxu0 0.0
    %280 = vmatprep.subr.mxu0 0.0
    %281 = vmatpush1.msra.mxu0 0.0
    %282 = vmatprep.subr.mxu0 0.0
    %283 = vmatpush1.msra.mxu0 0.0
    %284 = vmatprep.subr.mxu0 0.0
    %285 = vmatpush1.msra.mxu0 0.0
    %286 = vmatprep.subr.mxu0 0.0
    %287 = vmatpush1.msra.mxu0 0.0
    %288 = vmatprep.subr.mxu0 0.0
    %289 = vmatpush1.msra.mxu0 0.0
    %290 = vmatprep.subr.mxu0 0.0
    %291 = vmatpush1.msra.mxu0 %v258
    %292 = vmatprep.subr.mxu0 0.0
    %293 = vmatpush1.msra.mxu0 %v257
    %294 = vmatprep.subr.mxu0 0.0
    %295 = vmatpush1.msra.mxu0 %v256
    %296 = vmatprep.subr.mxu0 0.0
    %297 = vmatpush1.msra.mxu0 %v255
    %298 = vmatprep.subr.mxu0 0.0
    %299 = vmatpush2.msra.mxu0 0.0
    %300 = vmatprep.subr.mxu0 0.0
    %301 = vmatpush2.msra.mxu0 0.0
    %302 = vmatprep.subr.mxu0 0.0
    %303 = vmatpush2.msra.mxu0 0.0
    %304 = vmatprep.subr.mxu0 0.0
    %305 = vmatpush2.msra.mxu0 0.0
    %306 = vmatprep.subr.mxu0 0.0
    %307 = vmatpush2.msra.mxu0 0.0
    %308 = vmatprep.subr.mxu0 0.0
    %309 = vmatpush2.msra.mxu0 0.0
    %310 = vmatprep.subr.mxu0 0.0
    %311 = vmatpush2.msra.mxu0 0.0
    %312 = vmatprep.subr.mxu0 0.0
    %313 = vmatpush2.msra.mxu0 0.0
    %314 = vmatprep.subr.mxu0 0.0
    %315 = vmatpush2.msra.mxu0 0.0
    %316 = vmatprep.subr.mxu0 0.0
    %317 = vmatpush2.msra.mxu0 0.0
    %318 = vmatprep.subr.mxu0 0.0
    %319 = vmatpush2.msra.mxu0 0.0
    %320 = vmatprep.subr.mxu0 0.0
    %321 = vmatpush2.msra.mxu0 0.0
    %322 = vmatprep.subr.mxu0 0.0
    %323 = vmatpush2.msra.mxu0 0.0
    %324 = vmatprep.subr.mxu0 0.0
    %325 = vmatpush2.msra.mxu0 0.0
    %326 = vmatprep.subr.mxu0 0.0
    %327 = vmatpush2.msra.mxu0 0.0
    %328 = vmatprep.subr.mxu0 0.0
    %329 = vmatpush2.msra.mxu0 0.0
    %330 = vmatprep.mubr.f32.mxu0 0.0
    %331 = vmatmul.mubr.f32.gmra.mxu0 %v264
    %v332 = vpop.f32.mrf.mxu0
    %v333 = vadd.f32 %v262, %v332
    %v334 = vpop.f32.mrf.mxu0
    %335 = vdwg.mxu0
    %v336 = vmax.f32 %v333, 0.0
    %v337 = vld [vmem:[%s4] sm:$0xff]
    %v338 = vld [vmem:[%s4 + $0x8] sm:$0xff]
    %v339 = vld [vmem:[%s4 + $0x10] sm:$0xff]
    %v340 = vld [vmem:[%s4 + $0x18] sm:$0xff]
    %v341 = vld [vmem:[%s4 + $0x20] sm:$0xff]
    %v342 = vld [vmem:[%s4 + $0x28] sm:$0xff]
    %v343 = vld [vmem:[%s4 + $0x30] sm:$0xff]
    %v344 = vld [vmem:[%s4 + $0x38] sm:$0xff]
    %v345 = vlaneseq
    %v346 = vshrl.u32 %v345, 7
    %v347 = vsub.s32 7, %v346
    %v348 = vrot.slane %v39, %v347
    %vm349 = vcmask 523264
    %v351 = vsel %vm349, %v336, 0
    %353 = vmatprep.subr.mxu0 0.0
    %354 = vmatpush1.msra.mxu0 0.0
    %355 = vmatprep.subr.mxu0 0.0
    %356 = vmatpush1.msra.mxu0 0.0
    %357 = vmatprep.subr.mxu0 0.0
    %358 = vmatpush1.msra.mxu0 0.0
    %359 = vmatprep.subr.mxu0 0.0
    %360 = vmatpush1.msra.mxu0 0.0
    %361 = vmatprep.subr.mxu0 0.0
    %362 = vmatpush1.msra.mxu0 0.0
    %363 = vmatprep.subr.mxu0 0.0
    %364 = vmatpush1.msra.mxu0 0.0
    %365 = vmatprep.subr.mxu0 0.0
    %366 = vmatpush1.msra.mxu0 0.0
    %367 = vmatprep.subr.mxu0 0.0
    %368 = vmatpush1.msra.mxu0 0.0
    %369 = vmatprep.subr.mxu0 0.0
    %370 = vmatpush1.msra.mxu0 %v344
    %371 = vmatprep.subr.mxu0 0.0
    %372 = vmatpush1.msra.mxu0 %v343
    %373 = vmatprep.subr.mxu0 0.0
    %374 = vmatpush1.msra.mxu0 %v342
    %375 = vmatprep.subr.mxu0 0.0
    %376 = vmatpush1.msra.mxu0 %v341
    %377 = vmatprep.subr.mxu0 0.0
    %378 = vmatpush1.msra.mxu0 %v340
    %379 = vmatprep.subr.mxu0 0.0
    %380 = vmatpush1.msra.mxu0 %v339
    %381 = vmatprep.subr.mxu0 0.0
    %382 = vmatpush1.msra.mxu0 %v338
    %383 = vmatprep.subr.mxu0 0.0
    %384 = vmatpush1.msra.mxu0 %v337
    %385 = vmatprep.subr.mxu0 0.0
    %386 = vmatpush2.msra.mxu0 0.0
    %387 = vmatprep.subr.mxu0 0.0
    %388 = vmatpush2.msra.mxu0 0.0
    %389 = vmatprep.subr.mxu0 0.0
    %390 = vmatpush2.msra.mxu0 0.0
    %391 = vmatprep.subr.mxu0 0.0
    %392 = vmatpush2.msra.mxu0 0.0
    %393 = vmatprep.subr.mxu0 0.0
    %394 = vmatpush2.msra.mxu0 0.0
    %395 = vmatprep.subr.mxu0 0.0
    %396 = vmatpush2.msra.mxu0 0.0
    %397 = vmatprep.subr.mxu0 0.0
    %398 = vmatpush2.msra.mxu0 0.0
    %399 = vmatprep.subr.mxu0 0.0
    %400 = vmatpush2.msra.mxu0 0.0
    %401 = vmatprep.subr.mxu0 0.0
    %402 = vmatpush2.msra.mxu0 0.0
    %403 = vmatprep.subr.mxu0 0.0
    %404 = vmatpush2.msra.mxu0 0.0
    %405 = vmatprep.subr.mxu0 0.0
    %406 = vmatpush2.msra.mxu0 0.0
    %407 = vmatprep.subr.mxu0 0.0
    %408 = vmatpush2.msra.mxu0 0.0
    %409 = vmatprep.subr.mxu0 0.0
    %410 = vmatpush2.msra.mxu0 0.0
    %411 = vmatprep.subr.mxu0 0.0
    %412 = vmatpush2.msra.mxu0 0.0
    %413 = vmatprep.subr.mxu0 0.0
    %414 = vmatpush2.msra.mxu0 0.0
    %415 = vmatprep.subr.mxu0 0.0
    %416 = vmatpush2.msra.mxu0 0.0
    %417 = vmatprep.mubr.f32.mxu0 0.0
    %418 = vmatmul.mubr.f32.gmra.mxu0 %v351
    %v419 = vpop.f32.mrf.mxu0
    %v420 = vadd.f32 %v348, %v419
    %v421 = vpop.f32.mrf.mxu0
    %422 = vdwg.mxu0
    %v423 = vmax.f32 %v420, 0.0
    %v424 = vld [vmem:[%s5] sm:$0xff]
    %v425 = vld [vmem:[%s5 + $0x8] sm:$0xff]
    %v426 = vlaneseq
    %v427 = vshrl.u32 %v426, 7
    %v428 = vsub.s32 0, %v427
    %v429 = vrot.slane %v40, %v428
    %vm430 = vcmask 130048
    %v432 = vsel %vm430, %v423, 0
    %434 = vmatprep.subr.mxu0 0.0
    %435 = vmatpush1.msra.mxu0 0.0
    %436 = vmatprep.subr.mxu0 0.0
    %437 = vmatpush1.msra.mxu0 0.0
    %438 = vmatprep.subr.mxu0 0.0
    %439 = vmatpush1.msra.mxu0 0.0
    %440 = vmatprep.subr.mxu0 0.0
    %441 = vmatpush1.msra.mxu0 0.0
    %442 = vmatprep.subr.mxu0 0.0
    %443 = vmatpush1.msra.mxu0 0.0
    %444 = vmatprep.subr.mxu0 0.0
    %445 = vmatpush1.msra.mxu0 0.0
    %446 = vmatprep.subr.mxu0 0.0
    %447 = vmatpush1.msra.mxu0 0.0
    %448 = vmatprep.subr.mxu0 0.0
    %449 = vmatpush1.msra.mxu0 0.0
    %450 = vmatprep.subr.mxu0 0.0
    %451 = vmatpush1.msra.mxu0 0.0
    %452 = vmatprep.subr.mxu0 0.0
    %453 = vmatpush1.msra.mxu0 0.0
    %454 = vmatprep.subr.mxu0 0.0
    %455 = vmatpush1.msra.mxu0 0.0
    %456 = vmatprep.subr.mxu0 0.0
    %457 = vmatpush1.msra.mxu0 0.0
    %458 = vmatprep.subr.mxu0 0.0
    %459 = vmatpush1.msra.mxu0 0.0
    %460 = vmatprep.subr.mxu0 0.0
    %461 = vmatpush1.msra.mxu0 0.0
    %462 = vmatprep.subr.mxu0 0.0
    %463 = vmatpush1.msra.mxu0 %v425
    %464 = vmatprep.subr.mxu0 0.0
    %465 = vmatpush1.msra.mxu0 %v424
    %466 = vmatprep.subr.mxu0 0.0
    %467 = vmatpush2.msra.mxu0 0.0
    %468 = vmatprep.subr.mxu0 0.0
    %469 = vmatpush2.msra.mxu0 0.0
    %470 = vmatprep.subr.mxu0 0.0
    %471 = vmatpush2.msra.mxu0 0.0
    %472 = vmatprep.subr.mxu0 0.0
    %473 = vmatpush2.msra.mxu0 0.0
    %474 = vmatprep.subr.mxu0 0.0
    %475 = vmatpush2.msra.mxu0 0.0
    %476 = vmatprep.subr.mxu0 0.0
    %477 = vmatpush2.msra.mxu0 0.0
    %478 = vmatprep.subr.mxu0 0.0
    %479 = vmatpush2.msra.mxu0 0.0
    %480 = vmatprep.subr.mxu0 0.0
    %481 = vmatpush2.msra.mxu0 0.0
    %482 = vmatprep.subr.mxu0 0.0
    %483 = vmatpush2.msra.mxu0 0.0
    %484 = vmatprep.subr.mxu0 0.0
    %485 = vmatpush2.msra.mxu0 0.0
    %486 = vmatprep.subr.mxu0 0.0
    %487 = vmatpush2.msra.mxu0 0.0
    %488 = vmatprep.subr.mxu0 0.0
    %489 = vmatpush2.msra.mxu0 0.0
    %490 = vmatprep.subr.mxu0 0.0
    %491 = vmatpush2.msra.mxu0 0.0
    %492 = vmatprep.subr.mxu0 0.0
    %493 = vmatpush2.msra.mxu0 0.0
    %494 = vmatprep.subr.mxu0 0.0
    %495 = vmatpush2.msra.mxu0 0.0
    %496 = vmatprep.subr.mxu0 0.0
    %497 = vmatpush2.msra.mxu0 0.0
    %498 = vmatprep.mubr.f32.mxu0 0.0
    %499 = vmatmul.mubr.f32.gmra.mxu0 %v432
    %v500 = vpop.f32.mrf.mxu0
    %v501 = vadd.f32 %v429, %v500
    %v502 = vpop.f32.mrf.mxu0
    %503 = vdwg.mxu0
    %vm504 = vcmask 58368
    %v505 = vsel %vm504, %v501, 0.0
    %506 = vadd.xlane.f32.xlu0 %v505
    %v507 = vpop.xlane.xlu0 %506
    %v508 = vrcp.pop 8.0
    %v509 = vmul.f32 %v507, %v508
    %v510 = vsub.f32 %v501, %v509
    %512 = vset.pattern.permute.xlu0 16
    %513 = vperm.xlu0 %512, %v420
    %v514 = vpop.permute.xlu0 %513
    %v516 = vadd.f32 %v514, %v510
    %517 = vst.msk [vmem:[#allocation5] sm:$0x3] %vm504, %v516
    // Predicated region
    $region34: #{tpu_custom_call.1} parent=1 // pred_check
      _
    $region35: #{tpu_custom_call.1} parent=1 // pred_check_branch
      %519 = sbr.rel (0) target = $region37
    $region36: #{tpu_custom_call.1} parent=1 // pred_region
      %s521 = ssub.s32 32, 32
      %522 = vsyncadd [#allocation4], %s521
      %s524 = sshll.u32 [#allocation5], 4
      %s525 = int_to_ptr.vmem [resolvable:$true] %s524
      %527 = dma.vmem_to_hbm [thread:$0]  %s525, 32, %s7, [#allocation4]
    $region37: #{tpu_custom_call.1} parent=1 // pred_fallthru
      _
    // Predicated region
    $region38: #{tpu_custom_call.1} parent=1 // pred_check
      _
    $region39: #{tpu_custom_call.1} parent=1 // pred_check_branch
      %529 = sbr.rel (0) target = $region41
    $region40: #{tpu_custom_call.1} parent=1 // pred_region
      %530 = dma.done [#allocation4], 32
    $region41: #{tpu_custom_call.1} parent=1 // pred_fallthru
      _
    %531 = vsyncpa [#allocation3], 1
    %532 = vsyncpa [#allocation4], 1

</llo_original>
